<compile_context>
chip_gen: v7x
topology: tpu7x:2x2x1
jax: 0.10.0
libtpu: 0.0.40
codegen_flags: <defaults>
</compile_context>

<pallas_src>
import math

import jax
import jax.numpy as jnp
from jax.experimental import pallas as pl
from jax.experimental.pallas import tpu as pltpu


def _round_up(x, m):
    return ((x + m - 1) // m) * m


def mlp_kernel(x_ref, w1_ref, b1_ref, w2_ref, b2_ref, w3_ref, b3_ref, o_ref):
    # layer1 + relu1 (dropout1 = identity at inference). bf16 operands, f32 MXU acc.
    h1 = jnp.dot(x_ref[...], w1_ref[...], preferred_element_type=jnp.float32)
    h1 = jnp.maximum(h1 + b1_ref[...], 0.0)
    # layer2 + relu2 (dropout2 = identity at inference)
    h2 = jnp.dot(h1.astype(jnp.bfloat16), w2_ref[...],
                 preferred_element_type=jnp.float32)
    h2 = jnp.maximum(h2 + b2_ref[...], 0.0)
    # layer3 (lane-dense padded output)
    out = jnp.dot(h2.astype(jnp.bfloat16), w3_ref[...],
                  preferred_element_type=jnp.float32)
    o_ref[...] = (out + b3_ref[...]).astype(o_ref.dtype)


def pt_image_classifier_forward(x_nchw, params):
    """x_nchw: (B, C, H, W) float32.  Returns (B, num_classes) f32 logits."""
    w1, b1, w2, b2, w3, b3 = params
    B = x_nchw.shape[0]
    x_flat = x_nchw.reshape(B, -1)          # same flattening order as torch .view(B, -1)
    D = x_flat.shape[1]
    H1 = w1.shape[1]
    H2 = w2.shape[1]
    NC = w3.shape[1]

    # --- bf16 casts for the MXU (weights + activations); biases stay f32 ---
    x_bf = x_flat.astype(jnp.bfloat16)
    w1_bf = w1.astype(jnp.bfloat16)
    w2_bf = w2.astype(jnp.bfloat16)

    # --- lane-dense final projection: pad NC up to 128 lanes ---
    NCp = _round_up(NC, 128)
    w3_bf = jnp.zeros((H2, NCp), jnp.bfloat16).at[:, :NC].set(w3.astype(jnp.bfloat16))
    b3_p = jnp.zeros((1, NCp), jnp.float32).at[:, :NC].set(b3)

    # --- batch tiling: pad B to a sublane-friendly tile, grid over batch ---
    TB = min(128, _round_up(B, 8))
    Bp = _round_up(B, TB)
    if Bp != B:
        x_bf = jnp.pad(x_bf, ((0, Bp - B), (0, 0)))
    grid = (pl.cdiv(Bp, TB),)

    # Constant index_map for the weights -> fetched once, VMEM-resident across
    # all batch tiles.  x / out are tiled along the batch axis.
    x_spec = pl.BlockSpec((TB, D), lambda i: (i, 0))
    o_spec = pl.BlockSpec((TB, NCp), lambda i: (i, 0))
    resident = lambda shape: pl.BlockSpec(shape, lambda i: (0, 0))

    flops = 2 * Bp * (D * H1 + H1 * H2 + H2 * NCp)
    bytes_accessed = (
        x_bf.size * 2
        + (w1_bf.size + w2_bf.size + w3_bf.size) * 2
        + (b1.size + b2.size + b3_p.size) * 4
        + Bp * NCp * 4
    )

    out = pl.pallas_call(
        mlp_kernel,
        out_shape=jax.ShapeDtypeStruct((Bp, NCp), jnp.float32),
        grid=grid,
        in_specs=[
            x_spec,
            resident((D, H1)), resident((1, H1)),
            resident((H1, H2)), resident((1, H2)),
            resident((H2, NCp)), resident((1, NCp)),
        ],
        out_specs=o_spec,
        compiler_params=pltpu.CompilerParams(
            dimension_semantics=("parallel",)),
        cost_estimate=pl.CostEstimate(
            flops=flops, transcendentals=0, bytes_accessed=bytes_accessed),
    )(x_bf, w1_bf, b1, w2_bf, b2, w3_bf, b3_p)

    return out[:B, :NC]


def init_params(key, in_features, num_classes):
    """Deterministic init mimicking nn.Linear default (uniform +/- 1/sqrt(fan_in)).

    Weights are stored transposed vs. torch: (in_features, out_features), so the
    kernel computes y = x @ W + b.
    """
    dims = [(in_features, 256), (256, 64), (64, num_classes)]
    params = []
    for fan_in, fan_out in dims:
        kw, kb, key = jax.random.split(key, 3)
        bound = 1.0 / math.sqrt(fan_in)
        w = jax.random.uniform(kw, (fan_in, fan_out), jnp.float32, -bound, bound)
        b = jax.random.uniform(kb, (1, fan_out), jnp.float32, -bound, bound)
        params += [w, b]
    return tuple(params)


if __name__ == "__main__":
    B, C, H, W = 2, 4, 16, 16
    num_classes = 10

    key = jax.random.PRNGKey(0)
    kx, kp = jax.random.split(key)
    x = jax.random.normal(kx, (B, C, H, W), dtype=jnp.float32)
    params = init_params(kp, C * H * W, num_classes)

    out = pt_image_classifier_forward(x, params)
    out = jax.block_until_ready(out)

    # Reference with the same bf16-operand / f32-accumulate recipe as the kernel.
    w1, b1, w2, b2, w3, b3 = params
    xf = x.reshape(B, -1)
    h = jnp.dot(xf.astype(jnp.bfloat16), w1.astype(jnp.bfloat16),
                preferred_element_type=jnp.float32) + b1
    h = jnp.maximum(h, 0.0)
    h = jnp.dot(h.astype(jnp.bfloat16), w2.astype(jnp.bfloat16),
                preferred_element_type=jnp.float32) + b2
    h = jnp.maximum(h, 0.0)
    ref = jnp.dot(h.astype(jnp.bfloat16), w3.astype(jnp.bfloat16),
                  preferred_element_type=jnp.float32) + b3

    assert out.shape == (B, num_classes)
    assert jnp.allclose(out, ref, atol=1e-2, rtol=1e-2), float(
        jnp.max(jnp.abs(out - ref)))

    print("KERNEL_OK")
</pallas_src>

<mosaic_0001>
module attributes {stable_mosaic.version = 11 : i64} {
  func.func @mlp_kernel(%arg0: i32, %arg1: memref<8x1024xbf16, #tpu.memory_space<vmem>>, %arg2: memref<1024x256xbf16, #tpu.memory_space<vmem>>, %arg3: memref<1x256xf32, #tpu.memory_space<vmem>>, %arg4: memref<256x64xbf16, #tpu.memory_space<vmem>>, %arg5: memref<1x64xf32, #tpu.memory_space<vmem>>, %arg6: memref<64x128xbf16, #tpu.memory_space<vmem>>, %arg7: memref<1x128xf32, #tpu.memory_space<vmem>>, %arg8: memref<8x128xf32, #tpu.memory_space<vmem>>) attributes {dimension_semantics = [#tpu.dimension_semantics<parallel>], iteration_bounds = array<i64: 1>, scalar_prefetch = 0 : i64, scratch_operands = 0 : i64, tpu.core_type = #tpu.core_type<tc>, window_params = [{transform_indices = @transform_0, window_bounds = array<i64: 8, 1024>}, {pipeline_mode = #tpu.pipeline_mode<synchronous>, transform_indices = @transform_1, window_bounds = array<i64: 1024, 256>}, {pipeline_mode = #tpu.pipeline_mode<synchronous>, transform_indices = @transform_2, window_bounds = array<i64: 1, 256>}, {pipeline_mode = #tpu.pipeline_mode<synchronous>, transform_indices = @transform_3, window_bounds = array<i64: 256, 64>}, {pipeline_mode = #tpu.pipeline_mode<synchronous>, transform_indices = @transform_4, window_bounds = array<i64: 1, 64>}, {pipeline_mode = #tpu.pipeline_mode<synchronous>, transform_indices = @transform_5, window_bounds = array<i64: 64, 128>}, {pipeline_mode = #tpu.pipeline_mode<synchronous>, transform_indices = @transform_6, window_bounds = array<i64: 1, 128>}, {transform_indices = @transform_7, window_bounds = array<i64: 8, 128>}]} {
    %c0 = arith.constant 0 : index
    %c0_0 = arith.constant 0 : index
    %0 = vector.load %arg1[%c0, %c0_0] : memref<8x1024xbf16, #tpu.memory_space<vmem>>, vector<8x1024xbf16>
    %c0_1 = arith.constant 0 : index
    %c0_2 = arith.constant 0 : index
    %1 = vector.load %arg2[%c0_1, %c0_2] : memref<1024x256xbf16, #tpu.memory_space<vmem>>, vector<1024x256xbf16>
    %cst = arith.constant dense<0.000000e+00> : vector<8x256xf32>
    %2 = tpu.matmul %0, %1, %cst {dimension_numbers = #tpu.dot_dimension_numbers<[1], [0], [0], [1], [0, 0, 1, 1], [], []>} : vector<8x1024xbf16>, vector<1024x256xbf16>, vector<8x256xf32> -> vector<8x256xf32>
    %c0_3 = arith.constant 0 : index
    %c0_4 = arith.constant 0 : index
    %3 = vector.load %arg3[%c0_3, %c0_4] : memref<1x256xf32, #tpu.memory_space<vmem>>, vector<1x256xf32>
    %4 = vector.broadcast %3 : vector<1x256xf32> to vector<8x256xf32>
    %5 = arith.addf %2, %4 : vector<8x256xf32>
    %cst_5 = arith.constant 0.000000e+00 : f32
    %6 = vector.broadcast %cst_5 : f32 to vector<8x256xf32>
    %7 = arith.maximumf %5, %6 : vector<8x256xf32>
    %8 = arith.truncf %7 : vector<8x256xf32> to vector<8x256xbf16>
    %c0_6 = arith.constant 0 : index
    %c0_7 = arith.constant 0 : index
    %9 = vector.load %arg4[%c0_6, %c0_7] : memref<256x64xbf16, #tpu.memory_space<vmem>>, vector<256x64xbf16>
    %cst_8 = arith.constant dense<0.000000e+00> : vector<8x64xf32>
    %10 = tpu.matmul %8, %9, %cst_8 {dimension_numbers = #tpu.dot_dimension_numbers<[1], [0], [0], [1], [0, 0, 1, 1], [], []>} : vector<8x256xbf16>, vector<256x64xbf16>, vector<8x64xf32> -> vector<8x64xf32>
    %c0_9 = arith.constant 0 : index
    %c0_10 = arith.constant 0 : index
    %11 = vector.load %arg5[%c0_9, %c0_10] : memref<1x64xf32, #tpu.memory_space<vmem>>, vector<1x64xf32>
    %12 = vector.broadcast %11 : vector<1x64xf32> to vector<8x64xf32>
    %13 = arith.addf %10, %12 : vector<8x64xf32>
    %cst_11 = arith.constant 0.000000e+00 : f32
    %14 = vector.broadcast %cst_11 : f32 to vector<8x64xf32>
    %15 = arith.maximumf %13, %14 : vector<8x64xf32>
    %16 = arith.truncf %15 : vector<8x64xf32> to vector<8x64xbf16>
    %c0_12 = arith.constant 0 : index
    %c0_13 = arith.constant 0 : index
    %17 = vector.load %arg6[%c0_12, %c0_13] : memref<64x128xbf16, #tpu.memory_space<vmem>>, vector<64x128xbf16>
    %cst_14 = arith.constant dense<0.000000e+00> : vector<8x128xf32>
    %18 = tpu.matmul %16, %17, %cst_14 {dimension_numbers = #tpu.dot_dimension_numbers<[1], [0], [0], [1], [0, 0, 1, 1], [], []>} : vector<8x64xbf16>, vector<64x128xbf16>, vector<8x128xf32> -> vector<8x128xf32>
    %c0_15 = arith.constant 0 : index
    %c0_16 = arith.constant 0 : index
    %19 = vector.load %arg7[%c0_15, %c0_16] : memref<1x128xf32, #tpu.memory_space<vmem>>, vector<1x128xf32>
    %20 = vector.broadcast %19 : vector<1x128xf32> to vector<8x128xf32>
    %21 = arith.addf %18, %20 : vector<8x128xf32>
    %c0_17 = arith.constant 0 : index
    %c0_18 = arith.constant 0 : index
    %22 = vector.load %arg8[%c0_17, %c0_18] : memref<8x128xf32, #tpu.memory_space<vmem>>, vector<8x128xf32>
    tpu.vector_store %arg8[%c0_17, %c0_18], %21 {strides = array<i32>} : memref<8x128xf32, #tpu.memory_space<vmem>>, vector<8x128xf32>,
    return
  }
  func.func @transform_0(%arg0: i32) -> (i32, i32) {
    %c0_i32 = arith.constant 0 : i32
    %c0_i32_0 = arith.constant 0 : i32
    return %arg0, %c0_i32 : i32, i32
  }
  func.func @transform_1(%arg0: i32) -> (i32, i32) {
    %c0_i32 = arith.constant 0 : i32
    %c0_i32_0 = arith.constant 0 : i32
    %c0_i32_1 = arith.constant 0 : i32
    return %c0_i32, %c0_i32_0 : i32, i32
  }
  func.func @transform_2(%arg0: i32) -> (i32, i32) {
    %c0_i32 = arith.constant 0 : i32
    %c0_i32_0 = arith.constant 0 : i32
    %c0_i32_1 = arith.constant 0 : i32
    return %c0_i32, %c0_i32_0 : i32, i32
  }
  func.func @transform_3(%arg0: i32) -> (i32, i32) {
    %c0_i32 = arith.constant 0 : i32
    %c0_i32_0 = arith.constant 0 : i32
    %c0_i32_1 = arith.constant 0 : i32
    return %c0_i32, %c0_i32_0 : i32, i32
  }
  func.func @transform_4(%arg0: i32) -> (i32, i32) {
    %c0_i32 = arith.constant 0 : i32
    %c0_i32_0 = arith.constant 0 : i32
    %c0_i32_1 = arith.constant 0 : i32
    return %c0_i32, %c0_i32_0 : i32, i32
  }
  func.func @transform_5(%arg0: i32) -> (i32, i32) {
    %c0_i32 = arith.constant 0 : i32
    %c0_i32_0 = arith.constant 0 : i32
    %c0_i32_1 = arith.constant 0 : i32
    return %c0_i32, %c0_i32_0 : i32, i32
  }
  func.func @transform_6(%arg0: i32) -> (i32, i32) {
    %c0_i32 = arith.constant 0 : i32
    %c0_i32_0 = arith.constant 0 : i32
    %c0_i32_1 = arith.constant 0 : i32
    return %c0_i32, %c0_i32_0 : i32, i32
  }
  func.func @transform_7(%arg0: i32) -> (i32, i32) {
    %c0_i32 = arith.constant 0 : i32
    %c0_i32_0 = arith.constant 0 : i32
    return %arg0, %c0_i32 : i32, i32
  }
}

</mosaic_0001>

<llo_original>
// kernel: tpu_custom_call.1
$region0: #{tpu_custom_call.1}
  #allocation0 [shape = 'u32[]', space=smem, size = 0x4, offset = 0x4, fixed_abs, tag = 'smem constant byte address 0x4 - core index']
  #allocation1 [shape = 'u32[144,128]{1,0:T(1,128)}', space=vmem, size = 0x12000, scoped, tag = 'internal scratch']
  %s0 = inlined_call_operand.vmem [shape: bf16[8,1024], index: 0, kind: input, shape index: {}]
  %s1 = inlined_call_operand.hbm [shape: bf16[1024,256], index: 1, kind: input, shape index: {}]
  %s2 = inlined_call_operand.vmem [shape: f32[1,256], index: 2, kind: input, shape index: {}]
  %s3 = inlined_call_operand.vmem [shape: bf16[256,64], index: 3, kind: input, shape index: {}]
  %s4 = inlined_call_operand.vmem [shape: f32[1,64], index: 4, kind: input, shape index: {}]
  %s5 = inlined_call_operand.vmem [shape: bf16[64,128], index: 5, kind: input, shape index: {}]
  %s6 = inlined_call_operand.vmem [shape: f32[1,128], index: 6, kind: input, shape index: {}]
  %s7 = inlined_call_operand.hbm [shape: f32[8,128], index: 7, kind: output, shape index: {}]
  %s8 = sld [smem:[#allocation0]]
  $region42: #{tpu_custom_call.1} parent=0
    _
  %s10 = ssub.s32 1, %s8
  %s11 = scalar_select 0, %s10, %s8
  $region1: #{tpu_custom_call.1} parent=0
    #allocation2 [shape = 'u8[524288]{0}', space=vmem, size = 0x80000, scoped, tag = 'input window, operand 1, single buffered']
    #allocation3 [shape = 's32[1]{0}', space=sflag, size = 0x4, scoped, tag = 'scoped memory for tpu_custom_call.1']
    #allocation4 [shape = 's32[1]{0}', space=sflag, size = 0x4, scoped, tag = 'scoped memory for tpu_custom_call.1']
    #allocation5 [shape = 'u8[4096]{0}', space=vmem, size = 0x1000, scoped, tag = 'output window, operand 0, single buffered']
    %12 = vsyncpa [#allocation3], 0
    %13 = vsyncpa [#allocation4], 0
    // Predicated region
    $region2: #{tpu_custom_call.1} parent=1 // pred_check
      _
    $region3: #{tpu_custom_call.1} parent=1 // pred_check_branch
      %15 = sbr.rel (0) target = $region5
    $region4: #{tpu_custom_call.1} parent=1 // pred_region
      _
    $region5: #{tpu_custom_call.1} parent=1 // pred_fallthru
      _
    // Predicated region
    $region6: #{tpu_custom_call.1} parent=1 // pred_check
      _
    $region7: #{tpu_custom_call.1} parent=1 // pred_check_branch
      %17 = sbr.rel (0) target = $region9
    $region8: #{tpu_custom_call.1} parent=1 // pred_region
      %s19 = ssub.s32 16384, 16384
      %20 = vsyncadd [#allocation3], %s19
      %s21 = sshll.u32 [#allocation2], 4
      %s22 = int_to_ptr.vmem [resolvable:$true] %s21
      %27 = dma.hbm_to_vmem [thread:$0]  %s1, 16384, %s22, [#allocation3], 128, 128, 8
    $region9: #{tpu_custom_call.1} parent=1 // pred_fallthru
      _
    // Predicated region
    $region10: #{tpu_custom_call.1} parent=1 // pred_check
      _
    $region11: #{tpu_custom_call.1} parent=1 // pred_check_branch
      %29 = sbr.rel (0) target = $region13
    $region12: #{tpu_custom_call.1} parent=1 // pred_region
      _
    $region13: #{tpu_custom_call.1} parent=1 // pred_fallthru
      _
    // Predicated region
    $region14: #{tpu_custom_call.1} parent=1 // pred_check
      _
    $region15: #{tpu_custom_call.1} parent=1 // pred_check_branch
      %31 = sbr.rel (0) target = $region17
    $region16: #{tpu_custom_call.1} parent=1 // pred_region
      _
    $region17: #{tpu_custom_call.1} parent=1 // pred_fallthru
      _
    // Predicated region
    $region18: #{tpu_custom_call.1} parent=1 // pred_check
      _
    $region19: #{tpu_custom_call.1} parent=1 // pred_check_branch
      %33 = sbr.rel (0) target = $region21
    $region20: #{tpu_custom_call.1} parent=1 // pred_region
      _
    $region21: #{tpu_custom_call.1} parent=1 // pred_fallthru
      _
    // Predicated region
    $region22: #{tpu_custom_call.1} parent=1 // pred_check
      _
    $region23: #{tpu_custom_call.1} parent=1 // pred_check_branch
      %35 = sbr.rel (0) target = $region25
    $region24: #{tpu_custom_call.1} parent=1 // pred_region
      _
    $region25: #{tpu_custom_call.1} parent=1 // pred_fallthru
      _
    // Predicated region
    $region26: #{tpu_custom_call.1} parent=1 // pred_check
      _
    $region27: #{tpu_custom_call.1} parent=1 // pred_check_branch
      %37 = sbr.rel (0) target = $region29
    $region28: #{tpu_custom_call.1} parent=1 // pred_region
      _
    $region29: #{tpu_custom_call.1} parent=1 // pred_fallthru
      _
    // Predicated region
    $region30: #{tpu_custom_call.1} parent=1 // pred_check
      _
    $region31: #{tpu_custom_call.1} parent=1 // pred_check_branch
      %39 = sbr.rel (0) target = $region33
    $region32: #{tpu_custom_call.1} parent=1 // pred_region
      %40 = dma.done [#allocation3], 16384
    $region33: #{tpu_custom_call.1} parent=1 // pred_fallthru
      _
    %v42 = vld [vmem:[%s0] sm:$0xff]
    %v43 = vld [vmem:[%s0 + $0x8] sm:$0xff]
    %v44 = vld [vmem:[%s0 + $0x10] sm:$0xff]
    %v45 = vld [vmem:[%s0 + $0x18] sm:$0xff]
    %v46 = vld [vmem:[#allocation2] sm:$0xff]
    %v47 = vld [vmem:[#allocation2 + $0x8] sm:$0xff]
    %v48 = vld [vmem:[#allocation2 + $0x10] sm:$0xff]
    %v49 = vld [vmem:[#allocation2 + $0x18] sm:$0xff]
    %v50 = vld [vmem:[#allocation2 + $0x20] sm:$0xff]
    %v51 = vld [vmem:[#allocation2 + $0x28] sm:$0xff]
    %v52 = vld [vmem:[#allocation2 + $0x30] sm:$0xff]
    %v53 = vld [vmem:[#allocation2 + $0x38] sm:$0xff]
    %v54 = vld [vmem:[#allocation2 + $0x40] sm:$0xff]
    %v55 = vld [vmem:[#allocation2 + $0x48] sm:$0xff]
    %v56 = vld [vmem:[#allocation2 + $0x50] sm:$0xff]
    %v57 = vld [vmem:[#allocation2 + $0x58] sm:$0xff]
    %v58 = vld [vmem:[#allocation2 + $0x60] sm:$0xff]
    %v59 = vld [vmem:[#allocation2 + $0x68] sm:$0xff]
    %v60 = vld [vmem:[#allocation2 + $0x70] sm:$0xff]
    %v61 = vld [vmem:[#allocation2 + $0x78] sm:$0xff]
    %v62 = vld [vmem:[#allocation2 + $0x80] sm:$0xff]
    %v63 = vld [vmem:[#allocation2 + $0x88] sm:$0xff]
    %v64 = vld [vmem:[#allocation2 + $0x90] sm:$0xff]
    %v65 = vld [vmem:[#allocation2 + $0x98] sm:$0xff]
    %v66 = vld [vmem:[#allocation2 + $0xa0] sm:$0xff]
    %v67 = vld [vmem:[#allocation2 + $0xa8] sm:$0xff]
    %v68 = vld [vmem:[#allocation2 + $0xb0] sm:$0xff]
    %v69 = vld [vmem:[#allocation2 + $0xb8] sm:$0xff]
    %v70 = vld [vmem:[#allocation2 + $0xc0] sm:$0xff]
    %v71 = vld [vmem:[#allocation2 + $0xc8] sm:$0xff]
    %v72 = vld [vmem:[#allocation2 + $0xd0] sm:$0xff]
    %v73 = vld [vmem:[#allocation2 + $0xd8] sm:$0xff]
    %v74 = vld [vmem:[#allocation2 + $0xe0] sm:$0xff]
    %v75 = vld [vmem:[#allocation2 + $0xe8] sm:$0xff]
    %v76 = vld [vmem:[#allocation2 + $0xf0] sm:$0xff]
    %v77 = vld [vmem:[#allocation2 + $0xf8] sm:$0xff]
    %v78 = vld [vmem:[#allocation2 + $0x100] sm:$0xff]
    %v79 = vld [vmem:[#allocation2 + $0x108] sm:$0xff]
    %v80 = vld [vmem:[#allocation2 + $0x110] sm:$0xff]
    %v81 = vld [vmem:[#allocation2 + $0x118] sm:$0xff]
    %v82 = vld [vmem:[#allocation2 + $0x120] sm:$0xff]
    %v83 = vld [vmem:[#allocation2 + $0x128] sm:$0xff]
    %v84 = vld [vmem:[#allocation2 + $0x130] sm:$0xff]
    %v85 = vld [vmem:[#allocation2 + $0x138] sm:$0xff]
    %v86 = vld [vmem:[#allocation2 + $0x140] sm:$0xff]
    %v87 = vld [vmem:[#allocation2 + $0x148] sm:$0xff]
    %v88 = vld [vmem:[#allocation2 + $0x150] sm:$0xff]
    %v89 = vld [vmem:[#allocation2 + $0x158] sm:$0xff]
    %v90 = vld [vmem:[#allocation2 + $0x160] sm:$0xff]
    %v91 = vld [vmem:[#allocation2 + $0x168] sm:$0xff]
    %v92 = vld [vmem:[#allocation2 + $0x170] sm:$0xff]
    %v93 = vld [vmem:[#allocation2 + $0x178] sm:$0xff]
    %v94 = vld [vmem:[#allocation2 + $0x180] sm:$0xff]
    %v95 = vld [vmem:[#allocation2 + $0x188] sm:$0xff]
    %v96 = vld [vmem:[#allocation2 + $0x190] sm:$0xff]
    %v97 = vld [vmem:[#allocation2 + $0x198] sm:$0xff]
    %v98 = vld [vmem:[#allocation2 + $0x1a0] sm:$0xff]
    %v99 = vld [vmem:[#allocation2 + $0x1a8] sm:$0xff]
    %v100 = vld [vmem:[#allocation2 + $0x1b0] sm:$0xff]
    %v101 = vld [vmem:[#allocation2 + $0x1b8] sm:$0xff]
    %v102 = vld [vmem:[#allocation2 + $0x1c0] sm:$0xff]
    %v103 = vld [vmem:[#allocation2 + $0x1c8] sm:$0xff]
    %v104 = vld [vmem:[#allocation2 + $0x1d0] sm:$0xff]
    %v105 = vld [vmem:[#allocation2 + $0x1d8] sm:$0xff]
    %v106 = vld [vmem:[#allocation2 + $0x1e0] sm:$0xff]
    %v107 = vld [vmem:[#allocation2 + $0x1e8] sm:$0xff]
    %v108 = vld [vmem:[#allocation2 + $0x1f0] sm:$0xff]
    %v109 = vld [vmem:[#allocation2 + $0x1f8] sm:$0xff]
    %v110 = vld [vmem:[#allocation2 + $0x200] sm:$0xff]
    %v111 = vld [vmem:[#allocation2 + $0x208] sm:$0xff]
    %v112 = vld [vmem:[#allocation2 + $0x210] sm:$0xff]
    %v113 = vld [vmem:[#allocation2 + $0x218] sm:$0xff]
    %v114 = vld [vmem:[#allocation2 + $0x220] sm:$0xff]
    %v115 = vld [vmem:[#allocation2 + $0x228] sm:$0xff]
    %v116 = vld [vmem:[#allocation2 + $0x230] sm:$0xff]
    %v117 = vld [vmem:[#allocation2 + $0x238] sm:$0xff]
    %v118 = vld [vmem:[#allocation2 + $0x240] sm:$0xff]
    %v119 = vld [vmem:[#allocation2 + $0x248] sm:$0xff]
    %v120 = vld [vmem:[#allocation2 + $0x250] sm:$0xff]
    %v121 = vld [vmem:[#allocation2 + $0x258] sm:$0xff]
    %v122 = vld [vmem:[#allocation2 + $0x260] sm:$0xff]
    %v123 = vld [vmem:[#allocation2 + $0x268] sm:$0xff]
    %v124 = vld [vmem:[#allocation2 + $0x270] sm:$0xff]
    %v125 = vld [vmem:[#allocation2 + $0x278] sm:$0xff]
    %v126 = vld [vmem:[#allocation2 + $0x280] sm:$0xff]
    %v127 = vld [vmem:[#allocation2 + $0x288] sm:$0xff]
    %v128 = vld [vmem:[#allocation2 + $0x290] sm:$0xff]
    %v129 = vld [vmem:[#allocation2 + $0x298] sm:$0xff]
    %v130 = vld [vmem:[#allocation2 + $0x2a0] sm:$0xff]
    %v131 = vld [vmem:[#allocation2 + $0x2a8] sm:$0xff]
    %v132 = vld [vmem:[#allocation2 + $0x2b0] sm:$0xff]
    %v133 = vld [vmem:[#allocation2 + $0x2b8] sm:$0xff]
    %v134 = vld [vmem:[#allocation2 + $0x2c0] sm:$0xff]
    %v135 = vld [vmem:[#allocation2 + $0x2c8] sm:$0xff]
    %v136 = vld [vmem:[#allocation2 + $0x2d0] sm:$0xff]
    %v137 = vld [vmem:[#allocation2 + $0x2d8] sm:$0xff]
    %v138 = vld [vmem:[#allocation2 + $0x2e0] sm:$0xff]
    %v139 = vld [vmem:[#allocation2 + $0x2e8] sm:$0xff]
    %v140 = vld [vmem:[#allocation2 + $0x2f0] sm:$0xff]
    %v141 = vld [vmem:[#allocation2 + $0x2f8] sm:$0xff]
    %v142 = vld [vmem:[#allocation2 + $0x300] sm:$0xff]
    %v143 = vld [vmem:[#allocation2 + $0x308] sm:$0xff]
    %v144 = vld [vmem:[#allocation2 + $0x310] sm:$0xff]
    %v145 = vld [vmem:[#allocation2 + $0x318] sm:$0xff]
    %v146 = vld [vmem:[#allocation2 + $0x320] sm:$0xff]
    %v147 = vld [vmem:[#allocation2 + $0x328] sm:$0xff]
    %v148 = vld [vmem:[#allocation2 + $0x330] sm:$0xff]
    %v149 = vld [vmem:[#allocation2 + $0x338] sm:$0xff]
    %v150 = vld [vmem:[#allocation2 + $0x340] sm:$0xff]
    %v151 = vld [vmem:[#allocation2 + $0x348] sm:$0xff]
    %v152 = vld [vmem:[#allocation2 + $0x350] sm:$0xff]
    %v153 = vld [vmem:[#allocation2 + $0x358] sm:$0xff]
    %v154 = vld [vmem:[#allocation2 + $0x360] sm:$0xff]
    %v155 = vld [vmem:[#allocation2 + $0x368] sm:$0xff]
    %v156 = vld [vmem:[#allocation2 + $0x370] sm:$0xff]
    %v157 = vld [vmem:[#allocation2 + $0x378] sm:$0xff]
    %v158 = vld [vmem:[#allocation2 + $0x380] sm:$0xff]
    %v159 = vld [vmem:[#allocation2 + $0x388] sm:$0xff]
    %v160 = vld [vmem:[#allocation2 + $0x390] sm:$0xff]
    %v161 = vld [vmem:[#allocation2 + $0x398] sm:$0xff]
    %v162 = vld [vmem:[#allocation2 + $0x3a0] sm:$0xff]
    %v163 = vld [vmem:[#allocation2 + $0x3a8] sm:$0xff]
    %v164 = vld [vmem:[#allocation2 + $0x3b0] sm:$0xff]
    %v165 = vld [vmem:[#allocation2 + $0x3b8] sm:$0xff]
    %v166 = vld [vmem:[#allocation2 + $0x3c0] sm:$0xff]
    %v167 = vld [vmem:[#allocation2 + $0x3c8] sm:$0xff]
    %v168 = vld [vmem:[#allocation2 + $0x3d0] sm:$0xff]
    %v169 = vld [vmem:[#allocation2 + $0x3d8] sm:$0xff]
    %v170 = vld [vmem:[#allocation2 + $0x3e0] sm:$0xff]
    %v171 = vld [vmem:[#allocation2 + $0x3e8] sm:$0xff]
    %v172 = vld [vmem:[#allocation2 + $0x3f0] sm:$0xff]
    %v173 = vld [vmem:[#allocation2 + $0x3f8] sm:$0xff]
    %v174 = vld [vmem:[%s2] sm:$0x3]
    %v176 = vlaneseq
    %v177 = vshrl.u32 %v176, 7
    %v178 = vsub.s32 0, %v177
    %v179 = vrot.slane %v174, %v178
    %v180 = vlaneseq
    %v181 = vshrl.u32 %v180, 7
    %v182 = vsub.s32 1, %v181
    %v183 = vrot.slane %v174, %v182
    %v190 = vunpack.c.l.b16 %v42
    %v191 = vunpack.c.h.b16 %v42
    %v192 = vunpack.c.l.b16 %v43
    %v193 = vunpack.c.h.b16 %v43
    %v194 = vunpack.c.l.b16 %v44
    %v195 = vunpack.c.h.b16 %v44
    %v196 = vunpack.c.l.b16 %v45
    %v197 = vunpack.c.h.b16 %v45
    %v198 = vpack.c.b16 %v190, %v190
    %v199 = vpack.c.b16 %v191, %v191
    %v200 = vpack.c.b16 %v192, %v192
    %v201 = vpack.c.b16 %v193, %v193
    %v202 = vpack.c.b16 %v194, %v194
    %v203 = vpack.c.b16 %v195, %v195
    %v204 = vpack.c.b16 %v196, %v196
    %v205 = vpack.c.b16 %v197, %v197
    %v342 = vunpack.c.l.b16 %v46
    %v343 = vunpack.c.h.b16 %v46
    %v344 = vunpack.c.l.b16 %v47
    %v345 = vunpack.c.h.b16 %v47
    %v346 = vunpack.c.l.b16 %v48
    %v347 = vunpack.c.h.b16 %v48
    %v348 = vunpack.c.l.b16 %v49
    %v349 = vunpack.c.h.b16 %v49
    %v350 = vunpack.c.l.b16 %v50
    %v351 = vunpack.c.h.b16 %v50
    %v352 = vunpack.c.l.b16 %v51
    %v353 = vunpack.c.h.b16 %v51
    %v354 = vunpack.c.l.b16 %v52
    %v355 = vunpack.c.h.b16 %v52
    %v356 = vunpack.c.l.b16 %v53
    %v357 = vunpack.c.h.b16 %v53
    %v358 = vunpack.c.l.b16 %v54
    %v359 = vunpack.c.h.b16 %v54
    %v360 = vunpack.c.l.b16 %v55
    %v361 = vunpack.c.h.b16 %v55
    %v362 = vunpack.c.l.b16 %v56
    %v363 = vunpack.c.h.b16 %v56
    %v364 = vunpack.c.l.b16 %v57
    %v365 = vunpack.c.h.b16 %v57
    %v366 = vunpack.c.l.b16 %v58
    %v367 = vunpack.c.h.b16 %v58
    %v368 = vunpack.c.l.b16 %v59
    %v369 = vunpack.c.h.b16 %v59
    %v370 = vunpack.c.l.b16 %v60
    %v371 = vunpack.c.h.b16 %v60
    %v372 = vunpack.c.l.b16 %v61
    %v373 = vunpack.c.h.b16 %v61
    %v374 = vunpack.c.l.b16 %v62
    %v375 = vunpack.c.h.b16 %v62
    %v376 = vunpack.c.l.b16 %v63
    %v377 = vunpack.c.h.b16 %v63
    %v378 = vunpack.c.l.b16 %v64
    %v379 = vunpack.c.h.b16 %v64
    %v380 = vunpack.c.l.b16 %v65
    %v381 = vunpack.c.h.b16 %v65
    %v382 = vunpack.c.l.b16 %v66
    %v383 = vunpack.c.h.b16 %v66
    %v384 = vunpack.c.l.b16 %v67
    %v385 = vunpack.c.h.b16 %v67
    %v386 = vunpack.c.l.b16 %v68
    %v387 = vunpack.c.h.b16 %v68
    %v388 = vunpack.c.l.b16 %v69
    %v389 = vunpack.c.h.b16 %v69
    %v390 = vunpack.c.l.b16 %v70
    %v391 = vunpack.c.h.b16 %v70
    %v392 = vunpack.c.l.b16 %v71
    %v393 = vunpack.c.h.b16 %v71
    %v394 = vunpack.c.l.b16 %v72
    %v395 = vunpack.c.h.b16 %v72
    %v396 = vunpack.c.l.b16 %v73
    %v397 = vunpack.c.h.b16 %v73
    %v398 = vunpack.c.l.b16 %v74
    %v399 = vunpack.c.h.b16 %v74
    %v400 = vunpack.c.l.b16 %v75
    %v401 = vunpack.c.h.b16 %v75
    %v402 = vunpack.c.l.b16 %v76
    %v403 = vunpack.c.h.b16 %v76
    %v404 = vunpack.c.l.b16 %v77
    %v405 = vunpack.c.h.b16 %v77
    %v406 = vunpack.c.l.b16 %v78
    %v407 = vunpack.c.h.b16 %v78
    %v408 = vunpack.c.l.b16 %v79
    %v409 = vunpack.c.h.b16 %v79
    %v410 = vunpack.c.l.b16 %v80
    %v411 = vunpack.c.h.b16 %v80
    %v412 = vunpack.c.l.b16 %v81
    %v413 = vunpack.c.h.b16 %v81
    %v414 = vunpack.c.l.b16 %v82
    %v415 = vunpack.c.h.b16 %v82
    %v416 = vunpack.c.l.b16 %v83
    %v417 = vunpack.c.h.b16 %v83
    %v418 = vunpack.c.l.b16 %v84
    %v419 = vunpack.c.h.b16 %v84
    %v420 = vunpack.c.l.b16 %v85
    %v421 = vunpack.c.h.b16 %v85
    %v422 = vunpack.c.l.b16 %v86
    %v423 = vunpack.c.h.b16 %v86
    %v424 = vunpack.c.l.b16 %v87
    %v425 = vunpack.c.h.b16 %v87
    %v426 = vunpack.c.l.b16 %v88
    %v427 = vunpack.c.h.b16 %v88
    %v428 = vunpack.c.l.b16 %v89
    %v429 = vunpack.c.h.b16 %v89
    %v430 = vunpack.c.l.b16 %v90
    %v431 = vunpack.c.h.b16 %v90
    %v432 = vunpack.c.l.b16 %v91
    %v433 = vunpack.c.h.b16 %v91
    %v434 = vunpack.c.l.b16 %v92
    %v435 = vunpack.c.h.b16 %v92
    %v436 = vunpack.c.l.b16 %v93
    %v437 = vunpack.c.h.b16 %v93
    %v438 = vunpack.c.l.b16 %v94
    %v439 = vunpack.c.h.b16 %v94
    %v440 = vunpack.c.l.b16 %v95
    %v441 = vunpack.c.h.b16 %v95
    %v442 = vunpack.c.l.b16 %v96
    %v443 = vunpack.c.h.b16 %v96
    %v444 = vunpack.c.l.b16 %v97
    %v445 = vunpack.c.h.b16 %v97
    %v446 = vunpack.c.l.b16 %v98
    %v447 = vunpack.c.h.b16 %v98
    %v448 = vunpack.c.l.b16 %v99
    %v449 = vunpack.c.h.b16 %v99
    %v450 = vunpack.c.l.b16 %v100
    %v451 = vunpack.c.h.b16 %v100
    %v452 = vunpack.c.l.b16 %v101
    %v453 = vunpack.c.h.b16 %v101
    %v454 = vunpack.c.l.b16 %v102
    %v455 = vunpack.c.h.b16 %v102
    %v456 = vunpack.c.l.b16 %v103
    %v457 = vunpack.c.h.b16 %v103
    %v458 = vunpack.c.l.b16 %v104
    %v459 = vunpack.c.h.b16 %v104
    %v460 = vunpack.c.l.b16 %v105
    %v461 = vunpack.c.h.b16 %v105
    %v462 = vunpack.c.l.b16 %v106
    %v463 = vunpack.c.h.b16 %v106
    %v464 = vunpack.c.l.b16 %v107
    %v465 = vunpack.c.h.b16 %v107
    %v466 = vunpack.c.l.b16 %v108
    %v467 = vunpack.c.h.b16 %v108
    %v468 = vunpack.c.l.b16 %v109
    %v469 = vunpack.c.h.b16 %v109
    %v470 = vunpack.c.l.b16 %v110
    %v471 = vunpack.c.h.b16 %v110
    %v472 = vunpack.c.l.b16 %v111
    %v473 = vunpack.c.h.b16 %v111
    %v474 = vunpack.c.l.b16 %v112
    %v475 = vunpack.c.h.b16 %v112
    %v476 = vunpack.c.l.b16 %v113
    %v477 = vunpack.c.h.b16 %v113
    %v478 = vunpack.c.l.b16 %v114
    %v479 = vunpack.c.h.b16 %v114
    %v480 = vunpack.c.l.b16 %v115
    %v481 = vunpack.c.h.b16 %v115
    %v482 = vunpack.c.l.b16 %v116
    %v483 = vunpack.c.h.b16 %v116
    %v484 = vunpack.c.l.b16 %v117
    %v485 = vunpack.c.h.b16 %v117
    %v486 = vunpack.c.l.b16 %v118
    %v487 = vunpack.c.h.b16 %v118
    %v488 = vunpack.c.l.b16 %v119
    %v489 = vunpack.c.h.b16 %v119
    %v490 = vunpack.c.l.b16 %v120
    %v491 = vunpack.c.h.b16 %v120
    %v492 = vunpack.c.l.b16 %v121
    %v493 = vunpack.c.h.b16 %v121
    %v494 = vunpack.c.l.b16 %v122
    %v495 = vunpack.c.h.b16 %v122
    %v496 = vunpack.c.l.b16 %v123
    %v497 = vunpack.c.h.b16 %v123
    %v498 = vunpack.c.l.b16 %v124
    %v499 = vunpack.c.h.b16 %v124
    %v500 = vunpack.c.l.b16 %v125
    %v501 = vunpack.c.h.b16 %v125
    %v502 = vunpack.c.l.b16 %v126
    %v503 = vunpack.c.h.b16 %v126
    %v504 = vunpack.c.l.b16 %v127
    %v505 = vunpack.c.h.b16 %v127
    %v506 = vunpack.c.l.b16 %v128
    %v507 = vunpack.c.h.b16 %v128
    %v508 = vunpack.c.l.b16 %v129
    %v509 = vunpack.c.h.b16 %v129
    %v510 = vunpack.c.l.b16 %v130
    %v511 = vunpack.c.h.b16 %v130
    %v512 = vunpack.c.l.b16 %v131
    %v513 = vunpack.c.h.b16 %v131
    %v514 = vunpack.c.l.b16 %v132
    %v515 = vunpack.c.h.b16 %v132
    %v516 = vunpack.c.l.b16 %v133
    %v517 = vunpack.c.h.b16 %v133
    %v518 = vunpack.c.l.b16 %v134
    %v519 = vunpack.c.h.b16 %v134
    %v520 = vunpack.c.l.b16 %v135
    %v521 = vunpack.c.h.b16 %v135
    %v522 = vunpack.c.l.b16 %v136
    %v523 = vunpack.c.h.b16 %v136
    %v524 = vunpack.c.l.b16 %v137
    %v525 = vunpack.c.h.b16 %v137
    %v526 = vunpack.c.l.b16 %v138
    %v527 = vunpack.c.h.b16 %v138
    %v528 = vunpack.c.l.b16 %v139
    %v529 = vunpack.c.h.b16 %v139
    %v530 = vunpack.c.l.b16 %v140
    %v531 = vunpack.c.h.b16 %v140
    %v532 = vunpack.c.l.b16 %v141
    %v533 = vunpack.c.h.b16 %v141
    %v534 = vunpack.c.l.b16 %v142
    %v535 = vunpack.c.h.b16 %v142
    %v536 = vunpack.c.l.b16 %v143
    %v537 = vunpack.c.h.b16 %v143
    %v538 = vunpack.c.l.b16 %v144
    %v539 = vunpack.c.h.b16 %v144
    %v540 = vunpack.c.l.b16 %v145
    %v541 = vunpack.c.h.b16 %v145
    %v542 = vunpack.c.l.b16 %v146
    %v543 = vunpack.c.h.b16 %v146
    %v544 = vunpack.c.l.b16 %v147
    %v545 = vunpack.c.h.b16 %v147
    %v546 = vunpack.c.l.b16 %v148
    %v547 = vunpack.c.h.b16 %v148
    %v548 = vunpack.c.l.b16 %v149
    %v549 = vunpack.c.h.b16 %v149
    %v550 = vunpack.c.l.b16 %v150
    %v551 = vunpack.c.h.b16 %v150
    %v552 = vunpack.c.l.b16 %v151
    %v553 = vunpack.c.h.b16 %v151
    %v554 = vunpack.c.l.b16 %v152
    %v555 = vunpack.c.h.b16 %v152
    %v556 = vunpack.c.l.b16 %v153
    %v557 = vunpack.c.h.b16 %v153
    %v558 = vunpack.c.l.b16 %v154
    %v559 = vunpack.c.h.b16 %v154
    %v560 = vunpack.c.l.b16 %v155
    %v561 = vunpack.c.h.b16 %v155
    %v562 = vunpack.c.l.b16 %v156
    %v563 = vunpack.c.h.b16 %v156
    %v564 = vunpack.c.l.b16 %v157
    %v565 = vunpack.c.h.b16 %v157
    %v566 = vunpack.c.l.b16 %v158
    %v567 = vunpack.c.h.b16 %v158
    %v568 = vunpack.c.l.b16 %v159
    %v569 = vunpack.c.h.b16 %v159
    %v570 = vunpack.c.l.b16 %v160
    %v571 = vunpack.c.h.b16 %v160
    %v572 = vunpack.c.l.b16 %v161
    %v573 = vunpack.c.h.b16 %v161
    %v574 = vunpack.c.l.b16 %v162
    %v575 = vunpack.c.h.b16 %v162
    %v576 = vunpack.c.l.b16 %v163
    %v577 = vunpack.c.h.b16 %v163
    %v578 = vunpack.c.l.b16 %v164
    %v579 = vunpack.c.h.b16 %v164
    %v580 = vunpack.c.l.b16 %v165
    %v581 = vunpack.c.h.b16 %v165
    %v582 = vunpack.c.l.b16 %v166
    %v583 = vunpack.c.h.b16 %v166
    %v584 = vunpack.c.l.b16 %v167
    %v585 = vunpack.c.h.b16 %v167
    %v586 = vunpack.c.l.b16 %v168
    %v587 = vunpack.c.h.b16 %v168
    %v588 = vunpack.c.l.b16 %v169
    %v589 = vunpack.c.h.b16 %v169
    %v590 = vunpack.c.l.b16 %v170
    %v591 = vunpack.c.h.b16 %v170
    %v592 = vunpack.c.l.b16 %v171
    %v593 = vunpack.c.h.b16 %v171
    %v594 = vunpack.c.l.b16 %v172
    %v595 = vunpack.c.h.b16 %v172
    %v596 = vunpack.c.l.b16 %v173
    %v597 = vunpack.c.h.b16 %v173
    %v598 = vpack.c.b16 %v344, %v342
    %v599 = vpack.c.b16 %v345, %v343
    %v600 = vpack.c.b16 %v348, %v346
    %v601 = vpack.c.b16 %v349, %v347
    %v602 = vpack.c.b16 %v352, %v350
    %v603 = vpack.c.b16 %v353, %v351
    %v604 = vpack.c.b16 %v356, %v354
    %v605 = vpack.c.b16 %v357, %v355
    %v606 = vpack.c.b16 %v360, %v358
    %v607 = vpack.c.b16 %v361, %v359
    %v608 = vpack.c.b16 %v364, %v362
    %v609 = vpack.c.b16 %v365, %v363
    %v610 = vpack.c.b16 %v368, %v366
    %v611 = vpack.c.b16 %v369, %v367
    %v612 = vpack.c.b16 %v372, %v370
    %v613 = vpack.c.b16 %v373, %v371
    %v614 = vpack.c.b16 %v376, %v374
    %v615 = vpack.c.b16 %v377, %v375
    %v616 = vpack.c.b16 %v380, %v378
    %v617 = vpack.c.b16 %v381, %v379
    %v618 = vpack.c.b16 %v384, %v382
    %v619 = vpack.c.b16 %v385, %v383
    %v620 = vpack.c.b16 %v388, %v386
    %v621 = vpack.c.b16 %v389, %v387
    %v622 = vpack.c.b16 %v392, %v390
    %v623 = vpack.c.b16 %v393, %v391
    %v624 = vpack.c.b16 %v396, %v394
    %v625 = vpack.c.b16 %v397, %v395
    %v626 = vpack.c.b16 %v400, %v398
    %v627 = vpack.c.b16 %v401, %v399
    %v628 = vpack.c.b16 %v404, %v402
    %v629 = vpack.c.b16 %v405, %v403
    %v630 = vpack.c.b16 %v408, %v406
    %v631 = vpack.c.b16 %v409, %v407
    %v632 = vpack.c.b16 %v412, %v410
    %v633 = vpack.c.b16 %v413, %v411
    %v634 = vpack.c.b16 %v416, %v414
    %v635 = vpack.c.b16 %v417, %v415
    %v636 = vpack.c.b16 %v420, %v418
    %v637 = vpack.c.b16 %v421, %v419
    %v638 = vpack.c.b16 %v424, %v422
    %v639 = vpack.c.b16 %v425, %v423
    %v640 = vpack.c.b16 %v428, %v426
    %v641 = vpack.c.b16 %v429, %v427
    %v642 = vpack.c.b16 %v432, %v430
    %v643 = vpack.c.b16 %v433, %v431
    %v644 = vpack.c.b16 %v436, %v434
    %v645 = vpack.c.b16 %v437, %v435
    %v646 = vpack.c.b16 %v440, %v438
    %v647 = vpack.c.b16 %v441, %v439
    %v648 = vpack.c.b16 %v444, %v442
    %v649 = vpack.c.b16 %v445, %v443
    %v650 = vpack.c.b16 %v448, %v446
    %v651 = vpack.c.b16 %v449, %v447
    %v652 = vpack.c.b16 %v452, %v450
    %v653 = vpack.c.b16 %v453, %v451
    %v654 = vpack.c.b16 %v456, %v454
    %v655 = vpack.c.b16 %v457, %v455
    %v656 = vpack.c.b16 %v460, %v458
    %v657 = vpack.c.b16 %v461, %v459
    %v658 = vpack.c.b16 %v464, %v462
    %v659 = vpack.c.b16 %v465, %v463
    %v660 = vpack.c.b16 %v468, %v466
    %v661 = vpack.c.b16 %v469, %v467
    %v662 = vpack.c.b16 %v472, %v470
    %v663 = vpack.c.b16 %v473, %v471
    %v664 = vpack.c.b16 %v476, %v474
    %v665 = vpack.c.b16 %v477, %v475
    %v666 = vpack.c.b16 %v480, %v478
    %v667 = vpack.c.b16 %v481, %v479
    %v668 = vpack.c.b16 %v484, %v482
    %v669 = vpack.c.b16 %v485, %v483
    %v670 = vpack.c.b16 %v488, %v486
    %v671 = vpack.c.b16 %v489, %v487
    %v672 = vpack.c.b16 %v492, %v490
    %v673 = vpack.c.b16 %v493, %v491
    %v674 = vpack.c.b16 %v496, %v494
    %v675 = vpack.c.b16 %v497, %v495
    %v676 = vpack.c.b16 %v500, %v498
    %v677 = vpack.c.b16 %v501, %v499
    %v678 = vpack.c.b16 %v504, %v502
    %v679 = vpack.c.b16 %v505, %v503
    %v680 = vpack.c.b16 %v508, %v506
    %v681 = vpack.c.b16 %v509, %v507
    %v682 = vpack.c.b16 %v512, %v510
    %v683 = vpack.c.b16 %v513, %v511
    %v684 = vpack.c.b16 %v516, %v514
    %v685 = vpack.c.b16 %v517, %v515
    %v686 = vpack.c.b16 %v520, %v518
    %v687 = vpack.c.b16 %v521, %v519
    %v688 = vpack.c.b16 %v524, %v522
    %v689 = vpack.c.b16 %v525, %v523
    %v690 = vpack.c.b16 %v528, %v526
    %v691 = vpack.c.b16 %v529, %v527
    %v692 = vpack.c.b16 %v532, %v530
    %v693 = vpack.c.b16 %v533, %v531
    %v694 = vpack.c.b16 %v536, %v534
    %v695 = vpack.c.b16 %v537, %v535
    %v696 = vpack.c.b16 %v540, %v538
    %v697 = vpack.c.b16 %v541, %v539
    %v698 = vpack.c.b16 %v544, %v542
    %v699 = vpack.c.b16 %v545, %v543
    %v700 = vpack.c.b16 %v548, %v546
    %v701 = vpack.c.b16 %v549, %v547
    %v702 = vpack.c.b16 %v552, %v550
    %v703 = vpack.c.b16 %v553, %v551
    %v704 = vpack.c.b16 %v556, %v554
    %v705 = vpack.c.b16 %v557, %v555
    %v706 = vpack.c.b16 %v560, %v558
    %v707 = vpack.c.b16 %v561, %v559
    %v708 = vpack.c.b16 %v564, %v562
    %v709 = vpack.c.b16 %v565, %v563
    %v710 = vpack.c.b16 %v568, %v566
    %v711 = vpack.c.b16 %v569, %v567
    %v712 = vpack.c.b16 %v572, %v570
    %v713 = vpack.c.b16 %v573, %v571
    %v714 = vpack.c.b16 %v576, %v574
    %v715 = vpack.c.b16 %v577, %v575
    %v716 = vpack.c.b16 %v580, %v578
    %v717 = vpack.c.b16 %v581, %v579
    %v718 = vpack.c.b16 %v584, %v582
    %v719 = vpack.c.b16 %v585, %v583
    %v720 = vpack.c.b16 %v588, %v586
    %v721 = vpack.c.b16 %v589, %v587
    %v722 = vpack.c.b16 %v592, %v590
    %v723 = vpack.c.b16 %v593, %v591
    %v724 = vpack.c.b16 %v596, %v594
    %v725 = vpack.c.b16 %v597, %v595
    %854 = vmatprep.subr.bf16.mxu0 %v599
    %855 = vmatpush1.bf16.msra.mxu0 %v598
    %856 = vmatprep.subr.bf16.mxu0 %v601
    %857 = vmatpush1.bf16.msra.mxu0 %v600
    %858 = vmatprep.subr.bf16.mxu0 %v603
    %859 = vmatpush1.bf16.msra.mxu0 %v602
    %860 = vmatprep.subr.bf16.mxu0 %v605
    %861 = vmatpush1.bf16.msra.mxu0 %v604
    %862 = vmatprep.subr.bf16.mxu0 %v607
    %863 = vmatpush1.bf16.msra.mxu0 %v606
    %864 = vmatprep.subr.bf16.mxu0 %v609
    %865 = vmatpush1.bf16.msra.mxu0 %v608
    %866 = vmatprep.subr.bf16.mxu0 %v611
    %867 = vmatpush1.bf16.msra.mxu0 %v610
    %868 = vmatprep.subr.bf16.mxu0 %v613
    %869 = vmatpush1.bf16.msra.mxu0 %v612
    %870 = vmatprep.subr.bf16.mxu0 %v615
    %871 = vmatpush1.bf16.msra.mxu0 %v614
    %872 = vmatprep.subr.bf16.mxu0 %v617
    %873 = vmatpush1.bf16.msra.mxu0 %v616
    %874 = vmatprep.subr.bf16.mxu0 %v619
    %875 = vmatpush1.bf16.msra.mxu0 %v618
    %876 = vmatprep.subr.bf16.mxu0 %v621
    %877 = vmatpush1.bf16.msra.mxu0 %v620
    %878 = vmatprep.subr.bf16.mxu0 %v623
    %879 = vmatpush1.bf16.msra.mxu0 %v622
    %880 = vmatprep.subr.bf16.mxu0 %v625
    %881 = vmatpush1.bf16.msra.mxu0 %v624
    %882 = vmatprep.subr.bf16.mxu0 %v627
    %883 = vmatpush1.bf16.msra.mxu0 %v626
    %884 = vmatprep.subr.bf16.mxu0 %v629
    %885 = vmatpush1.bf16.msra.mxu0 %v628
    %886 = vmatprep.mubr.bf16.mxu0 %v199
    %887 = vmatmul.mubr.bf16.gmra.mrb[0].mxu0 %v198
    %v888 = vpop.f32.mrb[0].mxu0
    %v889 = vadd.f32 %v179, %v888
    %v890 = vpop.f32.mrb[0].mxu0
    %v891 = vadd.f32 %v183, %v890
    %v892 = vpop.f32.mrb[0].mxu0
    %v893 = vpop.f32.mrb[0].mxu0
    %894 = vdwg.mxu0
    %895 = vmatprep.subr.bf16.mxu0 %v631
    %896 = vmatpush1.bf16.msra.mxu0 %v630
    %897 = vmatprep.subr.bf16.mxu0 %v633
    %898 = vmatpush1.bf16.msra.mxu0 %v632
    %899 = vmatprep.subr.bf16.mxu0 %v635
    %900 = vmatpush1.bf16.msra.mxu0 %v634
    %901 = vmatprep.subr.bf16.mxu0 %v637
    %902 = vmatpush1.bf16.msra.mxu0 %v636
    %903 = vmatprep.subr.bf16.mxu0 %v639
    %904 = vmatpush1.bf16.msra.mxu0 %v638
    %905 = vmatprep.subr.bf16.mxu0 %v641
    %906 = vmatpush1.bf16.msra.mxu0 %v640
    %907 = vmatprep.subr.bf16.mxu0 %v643
    %908 = vmatpush1.bf16.msra.mxu0 %v642
    %909 = vmatprep.subr.bf16.mxu0 %v645
    %910 = vmatpush1.bf16.msra.mxu0 %v644
    %911 = vmatprep.subr.bf16.mxu0 %v647
    %912 = vmatpush1.bf16.msra.mxu0 %v646
    %913 = vmatprep.subr.bf16.mxu0 %v649
    %914 = vmatpush1.bf16.msra.mxu0 %v648
    %915 = vmatprep.subr.bf16.mxu0 %v651
    %916 = vmatpush1.bf16.msra.mxu0 %v650
    %917 = vmatprep.subr.bf16.mxu0 %v653
    %918 = vmatpush1.bf16.msra.mxu0 %v652
    %919 = vmatprep.subr.bf16.mxu0 %v655
    %920 = vmatpush1.bf16.msra.mxu0 %v654
    %921 = vmatprep.subr.bf16.mxu0 %v657
    %922 = vmatpush1.bf16.msra.mxu0 %v656
    %923 = vmatprep.subr.bf16.mxu0 %v659
    %924 = vmatpush1.bf16.msra.mxu0 %v658
    %925 = vmatprep.subr.bf16.mxu0 %v661
    %926 = vmatpush1.bf16.msra.mxu0 %v660
    %927 = vmatprep.mubr.bf16.mxu0 %v201
    %928 = vmatmul.mubr.bf16.gmra.mrb[0].mxu0 %v200
    %v929 = vpop.f32.mrb[0].mxu0
    %v930 = vadd.f32 %v889, %v929
    %v931 = vpop.f32.mrb[0].mxu0
    %v932 = vadd.f32 %v891, %v931
    %v933 = vpop.f32.mrb[0].mxu0
    %v934 = vpop.f32.mrb[0].mxu0
    %935 = vdwg.mxu0
    %936 = vmatprep.subr.bf16.mxu0 %v663
    %937 = vmatpush1.bf16.msra.mxu0 %v662
    %938 = vmatprep.subr.bf16.mxu0 %v665
    %939 = vmatpush1.bf16.msra.mxu0 %v664
    %940 = vmatprep.subr.bf16.mxu0 %v667
    %941 = vmatpush1.bf16.msra.mxu0 %v666
    %942 = vmatprep.subr.bf16.mxu0 %v669
    %943 = vmatpush1.bf16.msra.mxu0 %v668
    %944 = vmatprep.subr.bf16.mxu0 %v671
    %945 = vmatpush1.bf16.msra.mxu0 %v670
    %946 = vmatprep.subr.bf16.mxu0 %v673
    %947 = vmatpush1.bf16.msra.mxu0 %v672
    %948 = vmatprep.subr.bf16.mxu0 %v675
    %949 = vmatpush1.bf16.msra.mxu0 %v674
    %950 = vmatprep.subr.bf16.mxu0 %v677
    %951 = vmatpush1.bf16.msra.mxu0 %v676
    %952 = vmatprep.subr.bf16.mxu0 %v679
    %953 = vmatpush1.bf16.msra.mxu0 %v678
    %954 = vmatprep.subr.bf16.mxu0 %v681
    %955 = vmatpush1.bf16.msra.mxu0 %v680
    %956 = vmatprep.subr.bf16.mxu0 %v683
    %957 = vmatpush1.bf16.msra.mxu0 %v682
    %958 = vmatprep.subr.bf16.mxu0 %v685
    %959 = vmatpush1.bf16.msra.mxu0 %v684
    %960 = vmatprep.subr.bf16.mxu0 %v687
    %961 = vmatpush1.bf16.msra.mxu0 %v686
    %962 = vmatprep.subr.bf16.mxu0 %v689
    %963 = vmatpush1.bf16.msra.mxu0 %v688
    %964 = vmatprep.subr.bf16.mxu0 %v691
    %965 = vmatpush1.bf16.msra.mxu0 %v690
    %966 = vmatprep.subr.bf16.mxu0 %v693
    %967 = vmatpush1.bf16.msra.mxu0 %v692
    %968 = vmatprep.mubr.bf16.mxu0 %v203
    %969 = vmatmul.mubr.bf16.gmra.mrb[0].mxu0 %v202
    %v970 = vpop.f32.mrb[0].mxu0
    %v971 = vadd.f32 %v930, %v970
    %v972 = vpop.f32.mrb[0].mxu0
    %v973 = vadd.f32 %v932, %v972
    %v974 = vpop.f32.mrb[0].mxu0
    %v975 = vpop.f32.mrb[0].mxu0
    %976 = vdwg.mxu0
    %977 = vmatprep.subr.bf16.mxu0 %v695
    %978 = vmatpush1.bf16.msra.mxu0 %v694
    %979 = vmatprep.subr.bf16.mxu0 %v697
    %980 = vmatpush1.bf16.msra.mxu0 %v696
    %981 = vmatprep.subr.bf16.mxu0 %v699
    %982 = vmatpush1.bf16.msra.mxu0 %v698
    %983 = vmatprep.subr.bf16.mxu0 %v701
    %984 = vmatpush1.bf16.msra.mxu0 %v700
    %985 = vmatprep.subr.bf16.mxu0 %v703
    %986 = vmatpush1.bf16.msra.mxu0 %v702
    %987 = vmatprep.subr.bf16.mxu0 %v705
    %988 = vmatpush1.bf16.msra.mxu0 %v704
    %989 = vmatprep.subr.bf16.mxu0 %v707
    %990 = vmatpush1.bf16.msra.mxu0 %v706
    %991 = vmatprep.subr.bf16.mxu0 %v709
    %992 = vmatpush1.bf16.msra.mxu0 %v708
    %993 = vmatprep.subr.bf16.mxu0 %v711
    %994 = vmatpush1.bf16.msra.mxu0 %v710
    %995 = vmatprep.subr.bf16.mxu0 %v713
    %996 = vmatpush1.bf16.msra.mxu0 %v712
    %997 = vmatprep.subr.bf16.mxu0 %v715
    %998 = vmatpush1.bf16.msra.mxu0 %v714
    %999 = vmatprep.subr.bf16.mxu0 %v717
    %1000 = vmatpush1.bf16.msra.mxu0 %v716
    %1001 = vmatprep.subr.bf16.mxu0 %v719
    %1002 = vmatpush1.bf16.msra.mxu0 %v718
    %1003 = vmatprep.subr.bf16.mxu0 %v721
    %1004 = vmatpush1.bf16.msra.mxu0 %v720
    %1005 = vmatprep.subr.bf16.mxu0 %v723
    %1006 = vmatpush1.bf16.msra.mxu0 %v722
    %1007 = vmatprep.subr.bf16.mxu0 %v725
    %1008 = vmatpush1.bf16.msra.mxu0 %v724
    %1009 = vmatprep.mubr.bf16.mxu0 %v205
    %1010 = vmatmul.mubr.bf16.gmra.mrb[0].mxu0 %v204
    %v1011 = vpop.f32.mrb[0].mxu0
    %v1012 = vadd.f32 %v971, %v1011
    %v1013 = vpop.f32.mrb[0].mxu0
    %v1014 = vadd.f32 %v973, %v1013
    %v1015 = vpop.f32.mrb[0].mxu0
    %v1016 = vpop.f32.mrb[0].mxu0
    %1017 = vdwg.mxu0
    %v1018 = vmax.f32 %v1012, 0.0
    %v1019 = vmax.f32 %v1014, 0.0
    %v1020 = vpack.c.bf16 %v1018, %v1018
    %v1021 = vpack.c.bf16 %v1019, %v1019
    %v1022 = vld [vmem:[%s3] sm:$0xf]
    %v1023 = vld [vmem:[%s3 + $0x4] sm:$0xf]
    %v1024 = vld [vmem:[%s3 + $0x8] sm:$0xf]
    %v1025 = vld [vmem:[%s3 + $0xc] sm:$0xf]
    %v1026 = vld [vmem:[%s3 + $0x10] sm:$0xf]
    %v1027 = vld [vmem:[%s3 + $0x14] sm:$0xf]
    %v1028 = vld [vmem:[%s3 + $0x18] sm:$0xf]
    %v1029 = vld [vmem:[%s3 + $0x1c] sm:$0xf]
    %v1030 = vld [vmem:[%s3 + $0x20] sm:$0xf]
    %v1031 = vld [vmem:[%s3 + $0x24] sm:$0xf]
    %v1032 = vld [vmem:[%s3 + $0x28] sm:$0xf]
    %v1033 = vld [vmem:[%s3 + $0x2c] sm:$0xf]
    %v1034 = vld [vmem:[%s3 + $0x30] sm:$0xf]
    %v1035 = vld [vmem:[%s3 + $0x34] sm:$0xf]
    %v1036 = vld [vmem:[%s3 + $0x38] sm:$0xf]
    %v1037 = vld [vmem:[%s3 + $0x3c] sm:$0xf]
    %v1038 = vld [vmem:[%s3 + $0x40] sm:$0xf]
    %v1039 = vld [vmem:[%s3 + $0x44] sm:$0xf]
    %v1040 = vld [vmem:[%s3 + $0x48] sm:$0xf]
    %v1041 = vld [vmem:[%s3 + $0x4c] sm:$0xf]
    %v1042 = vld [vmem:[%s3 + $0x50] sm:$0xf]
    %v1043 = vld [vmem:[%s3 + $0x54] sm:$0xf]
    %v1044 = vld [vmem:[%s3 + $0x58] sm:$0xf]
    %v1045 = vld [vmem:[%s3 + $0x5c] sm:$0xf]
    %v1046 = vld [vmem:[%s3 + $0x60] sm:$0xf]
    %v1047 = vld [vmem:[%s3 + $0x64] sm:$0xf]
    %v1048 = vld [vmem:[%s3 + $0x68] sm:$0xf]
    %v1049 = vld [vmem:[%s3 + $0x6c] sm:$0xf]
    %v1050 = vld [vmem:[%s3 + $0x70] sm:$0xf]
    %v1051 = vld [vmem:[%s3 + $0x74] sm:$0xf]
    %v1052 = vld [vmem:[%s3 + $0x78] sm:$0xf]
    %v1053 = vld [vmem:[%s3 + $0x7c] sm:$0xf]
    %v1054 = vld [vmem:[%s4] sm:$0x1]
    %v1056 = vlaneseq
    %v1057 = vshrl.u32 %v1056, 7
    %v1058 = vsub.s32 0, %v1057
    %v1059 = vrot.slane %v1054, %v1058
    %v1093 = vunpack.c.l.b16 %v1022
    %v1094 = vunpack.c.l.b16 %v1023
    %v1095 = vunpack.c.l.b16 %v1024
    %v1096 = vunpack.c.l.b16 %v1025
    %v1097 = vunpack.c.l.b16 %v1026
    %v1098 = vunpack.c.l.b16 %v1027
    %v1099 = vunpack.c.l.b16 %v1028
    %v1100 = vunpack.c.l.b16 %v1029
    %v1101 = vunpack.c.l.b16 %v1030
    %v1102 = vunpack.c.l.b16 %v1031
    %v1103 = vunpack.c.l.b16 %v1032
    %v1104 = vunpack.c.l.b16 %v1033
    %v1105 = vunpack.c.l.b16 %v1034
    %v1106 = vunpack.c.l.b16 %v1035
    %v1107 = vunpack.c.l.b16 %v1036
    %v1108 = vunpack.c.l.b16 %v1037
    %v1109 = vunpack.c.l.b16 %v1038
    %v1110 = vunpack.c.l.b16 %v1039
    %v1111 = vunpack.c.l.b16 %v1040
    %v1112 = vunpack.c.l.b16 %v1041
    %v1113 = vunpack.c.l.b16 %v1042
    %v1114 = vunpack.c.l.b16 %v1043
    %v1115 = vunpack.c.l.b16 %v1044
    %v1116 = vunpack.c.l.b16 %v1045
    %v1117 = vunpack.c.l.b16 %v1046
    %v1118 = vunpack.c.l.b16 %v1047
    %v1119 = vunpack.c.l.b16 %v1048
    %v1120 = vunpack.c.l.b16 %v1049
    %v1121 = vunpack.c.l.b16 %v1050
    %v1122 = vunpack.c.l.b16 %v1051
    %v1123 = vunpack.c.l.b16 %v1052
    %v1124 = vunpack.c.l.b16 %v1053
    %v1125 = vpack.c.b16 %v1094, %v1093
    %v1126 = vpack.c.b16 %v1096, %v1095
    %v1127 = vpack.c.b16 %v1098, %v1097
    %v1128 = vpack.c.b16 %v1100, %v1099
    %v1129 = vpack.c.b16 %v1102, %v1101
    %v1130 = vpack.c.b16 %v1104, %v1103
    %v1131 = vpack.c.b16 %v1106, %v1105
    %v1132 = vpack.c.b16 %v1108, %v1107
    %v1133 = vpack.c.b16 %v1110, %v1109
    %v1134 = vpack.c.b16 %v1112, %v1111
    %v1135 = vpack.c.b16 %v1114, %v1113
    %v1136 = vpack.c.b16 %v1116, %v1115
    %v1137 = vpack.c.b16 %v1118, %v1117
    %v1138 = vpack.c.b16 %v1120, %v1119
    %v1139 = vpack.c.b16 %v1122, %v1121
    %v1140 = vpack.c.b16 %v1124, %v1123
    %1157 = vmatprep.subr.bf16.mxu0 0
    %1158 = vmatpush1.bf16.msra.mxu0 %v1125
    %1159 = vmatprep.subr.bf16.mxu0 0
    %1160 = vmatpush1.bf16.msra.mxu0 %v1126
    %1161 = vmatprep.subr.bf16.mxu0 0
    %1162 = vmatpush1.bf16.msra.mxu0 %v1127
    %1163 = vmatprep.subr.bf16.mxu0 0
    %1164 = vmatpush1.bf16.msra.mxu0 %v1128
    %1165 = vmatprep.subr.bf16.mxu0 0
    %1166 = vmatpush1.bf16.msra.mxu0 %v1129
    %1167 = vmatprep.subr.bf16.mxu0 0
    %1168 = vmatpush1.bf16.msra.mxu0 %v1130
    %1169 = vmatprep.subr.bf16.mxu0 0
    %1170 = vmatpush1.bf16.msra.mxu0 %v1131
    %1171 = vmatprep.subr.bf16.mxu0 0
    %1172 = vmatpush1.bf16.msra.mxu0 %v1132
    %1173 = vmatprep.subr.bf16.mxu0 0
    %1174 = vmatpush1.bf16.msra.mxu0 %v1133
    %1175 = vmatprep.subr.bf16.mxu0 0
    %1176 = vmatpush1.bf16.msra.mxu0 %v1134
    %1177 = vmatprep.subr.bf16.mxu0 0
    %1178 = vmatpush1.bf16.msra.mxu0 %v1135
    %1179 = vmatprep.subr.bf16.mxu0 0
    %1180 = vmatpush1.bf16.msra.mxu0 %v1136
    %1181 = vmatprep.subr.bf16.mxu0 0
    %1182 = vmatpush1.bf16.msra.mxu0 %v1137
    %1183 = vmatprep.subr.bf16.mxu0 0
    %1184 = vmatpush1.bf16.msra.mxu0 %v1138
    %1185 = vmatprep.subr.bf16.mxu0 0
    %1186 = vmatpush1.bf16.msra.mxu0 %v1139
    %1187 = vmatprep.subr.bf16.mxu0 0
    %1188 = vmatpush1.bf16.msra.mxu0 %v1140
    %1189 = vmatprep.mubr.bf16.mxu0 %v1021
    %1190 = vmatmul.mubr.bf16.gmra.mrb[0].mxu0 %v1020
    %v1191 = vpop.f32.mrb[0].mxu0
    %v1192 = vadd.f32 %v1059, %v1191
    %v1193 = vpop.f32.mrb[0].mxu0
    %v1194 = vpop.f32.mrb[0].mxu0
    %v1195 = vpop.f32.mrb[0].mxu0
    %1196 = vdwg.mxu0
    %v1197 = vmax.f32 %v1192, 0.0
    %v1198 = vpack.c.bf16 %v1197, %v1197
    %v1199 = vld [vmem:[%s5] sm:$0xf]
    %v1200 = vld [vmem:[%s5 + $0x4] sm:$0xf]
    %v1201 = vld [vmem:[%s5 + $0x8] sm:$0xf]
    %v1202 = vld [vmem:[%s5 + $0xc] sm:$0xf]
    %v1203 = vld [vmem:[%s5 + $0x10] sm:$0xf]
    %v1204 = vld [vmem:[%s5 + $0x14] sm:$0xf]
    %v1205 = vld [vmem:[%s5 + $0x18] sm:$0xf]
    %v1206 = vld [vmem:[%s5 + $0x1c] sm:$0xf]
    %v1207 = vld [vmem:[%s6] sm:$0x1]
    %v1209 = vlaneseq
    %v1210 = vshrl.u32 %v1209, 7
    %v1211 = vsub.s32 0, %v1210
    %v1212 = vrot.slane %v1207, %v1211
    %v1222 = vunpack.c.l.b16 %v1199
    %v1223 = vunpack.c.l.b16 %v1200
    %v1224 = vunpack.c.l.b16 %v1201
    %v1225 = vunpack.c.l.b16 %v1202
    %v1226 = vunpack.c.l.b16 %v1203
    %v1227 = vunpack.c.l.b16 %v1204
    %v1228 = vunpack.c.l.b16 %v1205
    %v1229 = vunpack.c.l.b16 %v1206
    %v1230 = vpack.c.b16 %v1223, %v1222
    %v1231 = vpack.c.b16 %v1225, %v1224
    %v1232 = vpack.c.b16 %v1227, %v1226
    %v1233 = vpack.c.b16 %v1229, %v1228
    %vm1238 = vcmask 523264
    %v1240 = vsel %vm1238, %v1198, 0
    %1242 = vmatprep.subr.bf16.mxu0 0
    %1243 = vmatpush1.bf16.msra.mxu0 %v1230
    %1244 = vmatprep.subr.bf16.mxu0 0
    %1245 = vmatpush1.bf16.msra.mxu0 %v1231
    %1246 = vmatprep.subr.bf16.mxu0 0
    %1247 = vmatpush1.bf16.msra.mxu0 %v1232
    %1248 = vmatprep.subr.bf16.mxu0 0
    %1249 = vmatpush1.bf16.msra.mxu0 %v1233
    %1250 = vmatprep.subr.bf16.mxu0 0
    %1251 = vmatpush1.bf16.msra.mxu0 0
    %1252 = vmatprep.subr.bf16.mxu0 0
    %1253 = vmatpush1.bf16.msra.mxu0 0
    %1254 = vmatprep.subr.bf16.mxu0 0
    %1255 = vmatpush1.bf16.msra.mxu0 0
    %1256 = vmatprep.subr.bf16.mxu0 0
    %1257 = vmatpush1.bf16.msra.mxu0 0
    %1258 = vmatprep.subr.bf16.mxu0 0
    %1259 = vmatpush1.bf16.msra.mxu0 0
    %1260 = vmatprep.subr.bf16.mxu0 0
    %1261 = vmatpush1.bf16.msra.mxu0 0
    %1262 = vmatprep.subr.bf16.mxu0 0
    %1263 = vmatpush1.bf16.msra.mxu0 0
    %1264 = vmatprep.subr.bf16.mxu0 0
    %1265 = vmatpush1.bf16.msra.mxu0 0
    %1266 = vmatprep.subr.bf16.mxu0 0
    %1267 = vmatpush1.bf16.msra.mxu0 0
    %1268 = vmatprep.subr.bf16.mxu0 0
    %1269 = vmatpush1.bf16.msra.mxu0 0
    %1270 = vmatprep.subr.bf16.mxu0 0
    %1271 = vmatpush1.bf16.msra.mxu0 0
    %1272 = vmatprep.subr.bf16.mxu0 0
    %1273 = vmatpush1.bf16.msra.mxu0 0
    %1274 = vmatprep.mubr.bf16.mxu0 0
    %1275 = vmatmul.mubr.bf16.gmra.mrb[0].mxu0 %v1240
    %v1276 = vpop.f32.mrb[0].mxu0
    %v1277 = vadd.f32 %v1212, %v1276
    %v1278 = vpop.f32.mrb[0].mxu0
    %v1279 = vpop.f32.mrb[0].mxu0
    %v1280 = vpop.f32.mrb[0].mxu0
    %1281 = vdwg.mxu0
    %1282 = vst [vmem:[#allocation5] sm:$0xff] %v1277
    // Predicated region
    $region34: #{tpu_custom_call.1} parent=1 // pred_check
      _
    $region35: #{tpu_custom_call.1} parent=1 // pred_check_branch
      %1284 = sbr.rel (0) target = $region37
    $region36: #{tpu_custom_call.1} parent=1 // pred_region
      %s1286 = ssub.s32 128, 128
      %1287 = vsyncadd [#allocation4], %s1286
      %s1289 = sshll.u32 [#allocation5], 4
      %s1290 = int_to_ptr.vmem [resolvable:$true] %s1289
      %1292 = dma.vmem_to_hbm [thread:$0]  %s1290, 128, %s7, [#allocation4]
    $region37: #{tpu_custom_call.1} parent=1 // pred_fallthru
      _
    // Predicated region
    $region38: #{tpu_custom_call.1} parent=1 // pred_check
      _
    $region39: #{tpu_custom_call.1} parent=1 // pred_check_branch
      %1294 = sbr.rel (0) target = $region41
    $region40: #{tpu_custom_call.1} parent=1 // pred_region
      %1295 = dma.done [#allocation4], 128
    $region41: #{tpu_custom_call.1} parent=1 // pred_fallthru
      _
    %1296 = vsyncpa [#allocation3], 1
    %1297 = vsyncpa [#allocation4], 1

</llo_original>
